<compile_context>
chip_gen: v6e
topology: v6e:2x2x1
jax: 0.10.0
libtpu: 0.0.40
codegen_flags: <defaults>
</compile_context>

<pallas_src>
import math

import jax
import jax.numpy as jnp
from jax.experimental import pallas as pl
from jax.experimental.pallas import tpu as pltpu

LANE = 128
ROW_GRANULE = 16      # bf16 output tile sublane packing
MAX_TB = 2048         # ~8 MiB peak VMEM at input_size=256 -> safe on v5e/v6e/v7x


def _round_up(x, m):
    return (x + m - 1) // m * m


def _choose_tiling(batch):
    """Pick (tb, b_pad): tile rows and padded batch.

    - tiny batches: single step, rounded to the 16-row granule.
    - otherwise: >=2 steps (v7x has 2 TCs), tiles capped at MAX_TB, step count
      chosen to minimize padding waste (ties prefer an even step count).
    """
    if batch < 2 * ROW_GRANULE:
        tb = _round_up(batch, ROW_GRANULE)
        return tb, tb
    min_steps = max(2, math.ceil(batch / MAX_TB))
    best = None
    for n in range(min_steps, min_steps + 8):
        tb = _round_up(math.ceil(batch / n), ROW_GRANULE)
        b_pad = n * tb
        key = (b_pad - batch, n % 2, n)          # waste, prefer-even, fewer steps
        if best is None or key < best[0]:
            best = (key, tb, b_pad)
    return best[1], best[2]


def _mlp_kernel(x_ref, w1_ref, b1_ref, w2_ref, b2_ref, w3_ref, b3_ref, o_ref):
    """One (TB, IN) batch tile of fc1 -> ReLU -> fc2 -> ReLU -> fc3."""
    # In-kernel f32 -> bf16 cast: avoids a separate wrapper-side cast op that
    # would read f32 and write bf16 to HBM before the kernel re-reads it.
    x = x_ref[...].astype(jnp.bfloat16)                    # (TB, IN)

    # fc1 + ReLU (bf16 MXU operands, f32 accumulate, f32 VPU bias/ReLU)
    h1 = jnp.dot(x, w1_ref[...], preferred_element_type=jnp.float32)
    h1 = jnp.maximum(h1 + b1_ref[...], 0.0)
    # TODO(synk): dropout1 (p=0.3) is identity in eval mode; training-mode
    # masking would need pltpu.prng_seed + pltpu.stateful_bernoulli in-kernel.

    # fc2 + ReLU (hidden width zero-padded 64 -> 128 lanes)
    h2 = jnp.dot(h1.astype(jnp.bfloat16), w2_ref[...],
                 preferred_element_type=jnp.float32)
    h2 = jnp.maximum(h2 + b2_ref[...], 0.0)
    # TODO(synk): dropout2 (p=0.3) is identity in eval mode.

    # fc3 logits: f32 accumulate, bf16 lane-dense store (halves writeback bytes)
    out = jnp.dot(h2.astype(jnp.bfloat16), w3_ref[...],
                  preferred_element_type=jnp.float32) + b3_ref[...]
    o_ref[...] = out.astype(o_ref.dtype)


def kanji_classifier_forward(x, params):
    """x: (batch, input_size) f32. Returns (batch, num_classes) bf16 logits."""
    batch, input_size = x.shape
    num_classes = int(params["num_classes"])
    h1w = params["w1"].shape[1]          # 128
    h2w = params["w2"].shape[1]          # 128 (padded from 64)
    cp = params["w3"].shape[1]           # num_classes padded to multiple of 128

    tb, b_pad = _choose_tiling(batch)
    if b_pad != batch:
        # Padding waste is kept small by the adaptive step count; padded rows
        # are sliced off below.
        x = jnp.pad(x, ((0, b_pad - batch), (0, 0)))

    flops = 2 * b_pad * (input_size * h1w + h1w * h2w + h2w * cp)
    bytes_accessed = (
        b_pad * input_size * 4                # x read (f32)
        + b_pad * cp * 2                      # logits write (bf16)
        + (params["w1"].size + params["w2"].size + params["w3"].size) * 2
        + (params["b1"].size + params["b2"].size + params["b3"].size) * 4)

    out = pl.pallas_call(
        _mlp_kernel,
        out_shape=jax.ShapeDtypeStruct((b_pad, cp), jnp.bfloat16),
        grid=(b_pad // tb,),
        in_specs=[
            pl.BlockSpec((tb, input_size), lambda i: (i, 0)),
            # Constant index_maps: weights/biases stay VMEM-resident across steps.
            pl.BlockSpec(params["w1"].shape, lambda i: (0, 0)),
            pl.BlockSpec(params["b1"].shape, lambda i: (0, 0)),
            pl.BlockSpec(params["w2"].shape, lambda i: (0, 0)),
            pl.BlockSpec(params["b2"].shape, lambda i: (0, 0)),
            pl.BlockSpec(params["w3"].shape, lambda i: (0, 0)),
            pl.BlockSpec(params["b3"].shape, lambda i: (0, 0)),
        ],
        out_specs=pl.BlockSpec((tb, cp), lambda i: (i, 0)),
        compiler_params=pltpu.CompilerParams(
            dimension_semantics=("parallel",)),
        cost_estimate=pl.CostEstimate(
            flops=flops, transcendentals=0, bytes_accessed=bytes_accessed),
    )(x, params["w1"], params["b1"], params["w2"], params["b2"],
      params["w3"], params["b3"])

    return out[:batch, :num_classes]


def init_params(key, input_size, num_classes):
    """nn.Linear-style U(-1/sqrt(fan_in), +1/sqrt(fan_in)) init.

    Weights stored (in, out) so the kernel does x @ W on the MXU. The 64-wide
    hidden layer and num_classes are zero-padded to 128 lanes; weights are
    bf16 (MXU-native, half DMA bytes), biases stay f32.
    """
    def linear(key, fan_in, fan_out, pad_out):
        kw, kb = jax.random.split(key)
        bound = 1.0 / math.sqrt(fan_in)
        w = jax.random.uniform(kw, (fan_in, fan_out), jnp.float32, -bound, bound)
        b = jax.random.uniform(kb, (1, fan_out), jnp.float32, -bound, bound)
        w = jnp.pad(w, ((0, 0), (0, pad_out - fan_out)))
        b = jnp.pad(b, ((0, 0), (0, pad_out - fan_out)))
        return w, b

    h1, h2 = 128, 64
    h2p = _round_up(h2, LANE)
    cp = _round_up(num_classes, LANE)

    k1, k2, k3 = jax.random.split(key, 3)
    w1, b1 = linear(k1, input_size, h1, _round_up(h1, LANE))
    w2, b2 = linear(k2, h1, h2, h2p)
    w3, b3 = linear(k3, h2, num_classes, cp)
    # Pad fc3's input (row) dim 64 -> 128; the padded h2 columns are exact
    # zeros so the extra rows never contribute.
    w3 = jnp.pad(w3, ((0, h2p - h2), (0, 0)))

    return dict(
        w1=w1.astype(jnp.bfloat16), b1=b1,
        w2=w2.astype(jnp.bfloat16), b2=b2,
        w3=w3.astype(jnp.bfloat16), b3=b3,
        num_classes=num_classes,
    )


def reference_forward(x, p):
    """Pure-JAX reference with identical bf16-operand / f32-accumulate math."""
    xb = x.astype(jnp.bfloat16)
    h1 = jnp.maximum(
        jnp.dot(xb, p["w1"], preferred_element_type=jnp.float32) + p["b1"], 0.0)
    h2 = jnp.maximum(
        jnp.dot(h1.astype(jnp.bfloat16), p["w2"],
                preferred_element_type=jnp.float32) + p["b2"], 0.0)
    out = jnp.dot(h2.astype(jnp.bfloat16), p["w3"],
                  preferred_element_type=jnp.float32) + p["b3"]
    return out.astype(jnp.bfloat16)[:, :p["num_classes"]]


if __name__ == "__main__":
    # Small shapes consistent with the module: flattened image features in, logits out.
    batch = 8
    input_size = 256      # e.g. 16x16 flattened grayscale kanji image
    num_classes = 16

    key = jax.random.PRNGKey(0)
    kx, kp = jax.random.split(key)
    x = jax.random.normal(kx, (batch, input_size), jnp.float32)
    params = init_params(kp, input_size, num_classes)

    out = jax.block_until_ready(kanji_classifier_forward(x, params))
    ref = reference_forward(x, params)

    assert out.shape == (batch, num_classes)
    diff = jnp.max(jnp.abs(out.astype(jnp.float32) - ref.astype(jnp.float32)))
    assert jnp.allclose(out.astype(jnp.float32), ref.astype(jnp.float32),
                        atol=2e-2, rtol=2e-2), float(diff)

    print("KERNEL_OK")
</pallas_src>

<mosaic_0001>
module attributes {stable_mosaic.version = 11 : i64} {
  func.func @_mlp_kernel(%arg0: i32, %arg1: memref<16x256xf32, #tpu.memory_space<vmem>>, %arg2: memref<256x128xbf16, #tpu.memory_space<vmem>>, %arg3: memref<1x128xf32, #tpu.memory_space<vmem>>, %arg4: memref<128x128xbf16, #tpu.memory_space<vmem>>, %arg5: memref<1x128xf32, #tpu.memory_space<vmem>>, %arg6: memref<128x128xbf16, #tpu.memory_space<vmem>>, %arg7: memref<1x128xf32, #tpu.memory_space<vmem>>, %arg8: memref<16x128xbf16, #tpu.memory_space<vmem>>) attributes {dimension_semantics = [#tpu.dimension_semantics<parallel>], iteration_bounds = array<i64: 1>, scalar_prefetch = 0 : i64, scratch_operands = 0 : i64, tpu.core_type = #tpu.core_type<tc>, window_params = [{transform_indices = @transform_0, window_bounds = array<i64: 16, 256>}, {pipeline_mode = #tpu.pipeline_mode<synchronous>, transform_indices = @transform_1, window_bounds = array<i64: 256, 128>}, {pipeline_mode = #tpu.pipeline_mode<synchronous>, transform_indices = @transform_2, window_bounds = array<i64: 1, 128>}, {pipeline_mode = #tpu.pipeline_mode<synchronous>, transform_indices = @transform_3, window_bounds = array<i64: 128, 128>}, {pipeline_mode = #tpu.pipeline_mode<synchronous>, transform_indices = @transform_4, window_bounds = array<i64: 1, 128>}, {pipeline_mode = #tpu.pipeline_mode<synchronous>, transform_indices = @transform_5, window_bounds = array<i64: 128, 128>}, {pipeline_mode = #tpu.pipeline_mode<synchronous>, transform_indices = @transform_6, window_bounds = array<i64: 1, 128>}, {transform_indices = @transform_7, window_bounds = array<i64: 16, 128>}]} {
    %c0 = arith.constant 0 : index
    %c0_0 = arith.constant 0 : index
    %0 = vector.load %arg1[%c0, %c0_0] : memref<16x256xf32, #tpu.memory_space<vmem>>, vector<16x256xf32>
    %1 = arith.truncf %0 : vector<16x256xf32> to vector<16x256xbf16>
    %c0_1 = arith.constant 0 : index
    %c0_2 = arith.constant 0 : index
    %2 = vector.load %arg2[%c0_1, %c0_2] : memref<256x128xbf16, #tpu.memory_space<vmem>>, vector<256x128xbf16>
    %cst = arith.constant dense<0.000000e+00> : vector<16x128xf32>
    %3 = tpu.matmul %1, %2, %cst {dimension_numbers = #tpu.dot_dimension_numbers<[1], [0], [0], [1], [0, 0, 1, 1], [], []>} : vector<16x256xbf16>, vector<256x128xbf16>, vector<16x128xf32> -> vector<16x128xf32>
    %c0_3 = arith.constant 0 : index
    %c0_4 = arith.constant 0 : index
    %4 = vector.load %arg3[%c0_3, %c0_4] : memref<1x128xf32, #tpu.memory_space<vmem>>, vector<1x128xf32>
    %5 = vector.broadcast %4 : vector<1x128xf32> to vector<16x128xf32>
    %6 = arith.addf %3, %5 : vector<16x128xf32>
    %cst_5 = arith.constant 0.000000e+00 : f32
    %7 = vector.broadcast %cst_5 : f32 to vector<16x128xf32>
    %8 = arith.maximumf %6, %7 : vector<16x128xf32>
    %9 = arith.truncf %8 : vector<16x128xf32> to vector<16x128xbf16>
    %c0_6 = arith.constant 0 : index
    %c0_7 = arith.constant 0 : index
    %10 = vector.load %arg4[%c0_6, %c0_7] : memref<128x128xbf16, #tpu.memory_space<vmem>>, vector<128x128xbf16>
    %cst_8 = arith.constant dense<0.000000e+00> : vector<16x128xf32>
    %11 = tpu.matmul %9, %10, %cst_8 {dimension_numbers = #tpu.dot_dimension_numbers<[1], [0], [0], [1], [0, 0, 1, 1], [], []>} : vector<16x128xbf16>, vector<128x128xbf16>, vector<16x128xf32> -> vector<16x128xf32>
    %c0_9 = arith.constant 0 : index
    %c0_10 = arith.constant 0 : index
    %12 = vector.load %arg5[%c0_9, %c0_10] : memref<1x128xf32, #tpu.memory_space<vmem>>, vector<1x128xf32>
    %13 = vector.broadcast %12 : vector<1x128xf32> to vector<16x128xf32>
    %14 = arith.addf %11, %13 : vector<16x128xf32>
    %cst_11 = arith.constant 0.000000e+00 : f32
    %15 = vector.broadcast %cst_11 : f32 to vector<16x128xf32>
    %16 = arith.maximumf %14, %15 : vector<16x128xf32>
    %17 = arith.truncf %16 : vector<16x128xf32> to vector<16x128xbf16>
    %c0_12 = arith.constant 0 : index
    %c0_13 = arith.constant 0 : index
    %18 = vector.load %arg6[%c0_12, %c0_13] : memref<128x128xbf16, #tpu.memory_space<vmem>>, vector<128x128xbf16>
    %cst_14 = arith.constant dense<0.000000e+00> : vector<16x128xf32>
    %19 = tpu.matmul %17, %18, %cst_14 {dimension_numbers = #tpu.dot_dimension_numbers<[1], [0], [0], [1], [0, 0, 1, 1], [], []>} : vector<16x128xbf16>, vector<128x128xbf16>, vector<16x128xf32> -> vector<16x128xf32>
    %c0_15 = arith.constant 0 : index
    %c0_16 = arith.constant 0 : index
    %20 = vector.load %arg7[%c0_15, %c0_16] : memref<1x128xf32, #tpu.memory_space<vmem>>, vector<1x128xf32>
    %21 = vector.broadcast %20 : vector<1x128xf32> to vector<16x128xf32>
    %22 = arith.addf %19, %21 : vector<16x128xf32>
    %23 = arith.truncf %22 : vector<16x128xf32> to vector<16x128xbf16>
    %c0_17 = arith.constant 0 : index
    %c0_18 = arith.constant 0 : index
    %24 = vector.load %arg8[%c0_17, %c0_18] : memref<16x128xbf16, #tpu.memory_space<vmem>>, vector<16x128xbf16>
    tpu.vector_store %arg8[%c0_17, %c0_18], %23 {strides = array<i32>} : memref<16x128xbf16, #tpu.memory_space<vmem>>, vector<16x128xbf16>,
    return
  }
  func.func @transform_0(%arg0: i32) -> (i32, i32) {
    %c0_i32 = arith.constant 0 : i32
    %c0_i32_0 = arith.constant 0 : i32
    return %arg0, %c0_i32 : i32, i32
  }
  func.func @transform_1(%arg0: i32) -> (i32, i32) {
    %c0_i32 = arith.constant 0 : i32
    %c0_i32_0 = arith.constant 0 : i32
    %c0_i32_1 = arith.constant 0 : i32
    return %c0_i32, %c0_i32_0 : i32, i32
  }
  func.func @transform_2(%arg0: i32) -> (i32, i32) {
    %c0_i32 = arith.constant 0 : i32
    %c0_i32_0 = arith.constant 0 : i32
    %c0_i32_1 = arith.constant 0 : i32
    return %c0_i32, %c0_i32_0 : i32, i32
  }
  func.func @transform_3(%arg0: i32) -> (i32, i32) {
    %c0_i32 = arith.constant 0 : i32
    %c0_i32_0 = arith.constant 0 : i32
    %c0_i32_1 = arith.constant 0 : i32
    return %c0_i32, %c0_i32_0 : i32, i32
  }
  func.func @transform_4(%arg0: i32) -> (i32, i32) {
    %c0_i32 = arith.constant 0 : i32
    %c0_i32_0 = arith.constant 0 : i32
    %c0_i32_1 = arith.constant 0 : i32
    return %c0_i32, %c0_i32_0 : i32, i32
  }
  func.func @transform_5(%arg0: i32) -> (i32, i32) {
    %c0_i32 = arith.constant 0 : i32
    %c0_i32_0 = arith.constant 0 : i32
    %c0_i32_1 = arith.constant 0 : i32
    return %c0_i32, %c0_i32_0 : i32, i32
  }
  func.func @transform_6(%arg0: i32) -> (i32, i32) {
    %c0_i32 = arith.constant 0 : i32
    %c0_i32_0 = arith.constant 0 : i32
    %c0_i32_1 = arith.constant 0 : i32
    return %c0_i32, %c0_i32_0 : i32, i32
  }
  func.func @transform_7(%arg0: i32) -> (i32, i32) {
    %c0_i32 = arith.constant 0 : i32
    %c0_i32_0 = arith.constant 0 : i32
    return %arg0, %c0_i32 : i32, i32
  }
}

</mosaic_0001>

<llo_original>
// kernel: tpu_custom_call.1
$region0: #{tpu_custom_call.1}
  #allocation0 [shape = 'u32[]', space=smem, size = 0x4, offset = 0x4, fixed_abs, tag = 'smem constant byte address 0x4 - core index']
  #allocation1 [shape = 'u32[144,128]{1,0:T(1,128)}', space=vmem, size = 0x12000, scoped, tag = 'internal scratch']
  %s0 = inlined_call_operand.hbm [shape: f32[16,256], index: 0, kind: input, shape index: {}]
  %s1 = inlined_call_operand.hbm [shape: bf16[256,128], index: 1, kind: input, shape index: {}]
  %s2 = inlined_call_operand.vmem [shape: f32[1,128], index: 2, kind: input, shape index: {}]
  %s3 = inlined_call_operand.hbm [shape: bf16[128,128], index: 3, kind: input, shape index: {}]
  %s4 = inlined_call_operand.vmem [shape: f32[1,128], index: 4, kind: input, shape index: {}]
  %s5 = inlined_call_operand.hbm [shape: bf16[128,128], index: 5, kind: input, shape index: {}]
  %s6 = inlined_call_operand.vmem [shape: f32[1,128], index: 6, kind: input, shape index: {}]
  %s7 = inlined_call_operand.hbm [shape: bf16[16,128], index: 7, kind: output, shape index: {}]
  %s8 = sld [smem:[#allocation0]]
  $region54: #{tpu_custom_call.1} parent=0
    _
  %s10 = ssub.s32 1, %s8
  %s11 = scalar_select 0, %s10, %s8
  $region1: #{tpu_custom_call.1} parent=0
    #allocation2 [shape = 'u8[16384]{0}', space=vmem, size = 0x4000, scoped, tag = 'input window, operand 0, single buffered']
    #allocation3 [shape = 's32[1]{0}', space=sflag, size = 0x4, scoped, tag = 'scoped memory for tpu_custom_call.1']
    #allocation4 [shape = 's32[1]{0}', space=sflag, size = 0x4, scoped, tag = 'scoped memory for tpu_custom_call.1']
    #allocation5 [shape = 'u8[65536]{0}', space=vmem, size = 0x10000, scoped, tag = 'input window, operand 1, single buffered']
    #allocation6 [shape = 's32[1]{0}', space=sflag, size = 0x4, scoped, tag = 'scoped memory for tpu_custom_call.1']
    #allocation7 [shape = 'u8[32768]{0}', space=vmem, size = 0x8000, scoped, tag = 'input window, operand 3, single buffered']
    #allocation8 [shape = 'u8[32768]{0}', space=vmem, size = 0x8000, scoped, tag = 'input window, operand 5, single buffered']
    #allocation9 [shape = 's32[1]{0}', space=sflag, size = 0x4, scoped, tag = 'scoped memory for tpu_custom_call.1']
    #allocation10 [shape = 'u8[4096]{0}', space=vmem, size = 0x1000, scoped, tag = 'output window, operand 0, single buffered']
    %12 = vsyncpa [#allocation3], 0
    %13 = vsyncpa [#allocation6], 0
    %14 = vsyncpa [#allocation9], 0
    %15 = vsyncpa [#allocation4], 0
    // Predicated region
    $region2: #{tpu_custom_call.1} parent=1 // pred_check
      _
    $region3: #{tpu_custom_call.1} parent=1 // pred_check_branch
      %17 = sbr.rel (0) target = $region5
    $region4: #{tpu_custom_call.1} parent=1 // pred_region
      %s19 = ssub.s32 512, 512
      %20 = vsyncadd [#allocation3], %s19
      %s21 = sshll.u32 [#allocation2], 4
      %s22 = int_to_ptr.vmem [resolvable:$true] %s21
      %27 = dma.hbm_to_vmem [thread:$0]  %s0, 512, %s22, [#allocation3], 256, 256, 16
    $region5: #{tpu_custom_call.1} parent=1 // pred_fallthru
      _
    // Predicated region
    $region6: #{tpu_custom_call.1} parent=1 // pred_check
      _
    $region7: #{tpu_custom_call.1} parent=1 // pred_check_branch
      %29 = sbr.rel (0) target = $region9
    $region8: #{tpu_custom_call.1} parent=1 // pred_region
      %s31 = ssub.s32 2048, 2048
      %32 = vsyncadd [#allocation6], %s31
      %s33 = sshll.u32 [#allocation5], 4
      %s34 = int_to_ptr.vmem [resolvable:$true] %s33
      %39 = dma.hbm_to_vmem [thread:$0]  %s1, 2048, %s34, [#allocation6], 64, 64, 4
    $region9: #{tpu_custom_call.1} parent=1 // pred_fallthru
      _
    // Predicated region
    $region10: #{tpu_custom_call.1} parent=1 // pred_check
      _
    $region11: #{tpu_custom_call.1} parent=1 // pred_check_branch
      %41 = sbr.rel (0) target = $region13
    $region12: #{tpu_custom_call.1} parent=1 // pred_region
      _
    $region13: #{tpu_custom_call.1} parent=1 // pred_fallthru
      _
    // Predicated region
    $region14: #{tpu_custom_call.1} parent=1 // pred_check
      _
    $region15: #{tpu_custom_call.1} parent=1 // pred_check_branch
      %43 = sbr.rel (0) target = $region17
    $region16: #{tpu_custom_call.1} parent=1 // pred_region
      %s45 = ssub.s32 1024, 1024
      %46 = vsyncadd [#allocation6], %s45
      %s47 = sshll.u32 [#allocation7], 4
      %s48 = int_to_ptr.vmem [resolvable:$true] %s47
      %53 = dma.hbm_to_vmem [thread:$0]  %s3, 1024, %s48, [#allocation6], 64, 64, 4
    $region17: #{tpu_custom_call.1} parent=1 // pred_fallthru
      _
    // Predicated region
    $region18: #{tpu_custom_call.1} parent=1 // pred_check
      _
    $region19: #{tpu_custom_call.1} parent=1 // pred_check_branch
      %55 = sbr.rel (0) target = $region21
    $region20: #{tpu_custom_call.1} parent=1 // pred_region
      _
    $region21: #{tpu_custom_call.1} parent=1 // pred_fallthru
      _
    // Predicated region
    $region22: #{tpu_custom_call.1} parent=1 // pred_check
      _
    $region23: #{tpu_custom_call.1} parent=1 // pred_check_branch
      %57 = sbr.rel (0) target = $region25
    $region24: #{tpu_custom_call.1} parent=1 // pred_region
      %s59 = ssub.s32 1024, 1024
      %60 = vsyncadd [#allocation9], %s59
      %s61 = sshll.u32 [#allocation8], 4
      %s62 = int_to_ptr.vmem [resolvable:$true] %s61
      %67 = dma.hbm_to_vmem [thread:$0]  %s5, 1024, %s62, [#allocation9], 64, 64, 4
    $region25: #{tpu_custom_call.1} parent=1 // pred_fallthru
      _
    // Predicated region
    $region26: #{tpu_custom_call.1} parent=1 // pred_check
      _
    $region27: #{tpu_custom_call.1} parent=1 // pred_check_branch
      %69 = sbr.rel (0) target = $region29
    $region28: #{tpu_custom_call.1} parent=1 // pred_region
      _
    $region29: #{tpu_custom_call.1} parent=1 // pred_fallthru
      _
    // Predicated region
    $region30: #{tpu_custom_call.1} parent=1 // pred_check
      _
    $region31: #{tpu_custom_call.1} parent=1 // pred_check_branch
      %71 = sbr.rel (0) target = $region33
    $region32: #{tpu_custom_call.1} parent=1 // pred_region
      %72 = dma.done [#allocation3], 512
    $region33: #{tpu_custom_call.1} parent=1 // pred_fallthru
      _
    // Predicated region
    $region34: #{tpu_custom_call.1} parent=1 // pred_check
      _
    $region35: #{tpu_custom_call.1} parent=1 // pred_check_branch
      %74 = sbr.rel (0) target = $region37
    $region36: #{tpu_custom_call.1} parent=1 // pred_region
      %75 = dma.done [#allocation6], 2048
    $region37: #{tpu_custom_call.1} parent=1 // pred_fallthru
      _
    // Predicated region
    $region38: #{tpu_custom_call.1} parent=1 // pred_check
      _
    $region39: #{tpu_custom_call.1} parent=1 // pred_check_branch
      %77 = sbr.rel (0) target = $region41
    $region40: #{tpu_custom_call.1} parent=1 // pred_region
      %78 = dma.done [#allocation6], 1024
    $region41: #{tpu_custom_call.1} parent=1 // pred_fallthru
      _
    // Predicated region
    $region42: #{tpu_custom_call.1} parent=1 // pred_check
      _
    $region43: #{tpu_custom_call.1} parent=1 // pred_check_branch
      %80 = sbr.rel (0) target = $region45
    $region44: #{tpu_custom_call.1} parent=1 // pred_region
      %81 = dma.done [#allocation9], 1024
    $region45: #{tpu_custom_call.1} parent=1 // pred_fallthru
      _
    %v83 = vld [vmem:[#allocation2] sm:$0xff]
    %v84 = vld [vmem:[#allocation2 + $0x8] sm:$0xff]
    %v85 = vld [vmem:[#allocation2 + $0x10] sm:$0xff]
    %v86 = vld [vmem:[#allocation2 + $0x18] sm:$0xff]
    %v87 = vpack.c.bf16 %v85, %v83
    %v88 = vpack.c.bf16 %v86, %v84
    %v89 = vld [vmem:[#allocation5] sm:$0xf]
    %v90 = vld [vmem:[#allocation5 + $0x4] sm:$0xf]
    %v91 = vld [vmem:[#allocation5 + $0x8] sm:$0xf]
    %v92 = vld [vmem:[#allocation5 + $0xc] sm:$0xf]
    %v93 = vld [vmem:[#allocation5 + $0x10] sm:$0xf]
    %v94 = vld [vmem:[#allocation5 + $0x14] sm:$0xf]
    %v95 = vld [vmem:[#allocation5 + $0x18] sm:$0xf]
    %v96 = vld [vmem:[#allocation5 + $0x1c] sm:$0xf]
    %v97 = vld [vmem:[#allocation5 + $0x20] sm:$0xf]
    %v98 = vld [vmem:[#allocation5 + $0x24] sm:$0xf]
    %v99 = vld [vmem:[#allocation5 + $0x28] sm:$0xf]
    %v100 = vld [vmem:[#allocation5 + $0x2c] sm:$0xf]
    %v101 = vld [vmem:[#allocation5 + $0x30] sm:$0xf]
    %v102 = vld [vmem:[#allocation5 + $0x34] sm:$0xf]
    %v103 = vld [vmem:[#allocation5 + $0x38] sm:$0xf]
    %v104 = vld [vmem:[#allocation5 + $0x3c] sm:$0xf]
    %v105 = vld [vmem:[#allocation5 + $0x40] sm:$0xf]
    %v106 = vld [vmem:[#allocation5 + $0x44] sm:$0xf]
    %v107 = vld [vmem:[#allocation5 + $0x48] sm:$0xf]
    %v108 = vld [vmem:[#allocation5 + $0x4c] sm:$0xf]
    %v109 = vld [vmem:[#allocation5 + $0x50] sm:$0xf]
    %v110 = vld [vmem:[#allocation5 + $0x54] sm:$0xf]
    %v111 = vld [vmem:[#allocation5 + $0x58] sm:$0xf]
    %v112 = vld [vmem:[#allocation5 + $0x5c] sm:$0xf]
    %v113 = vld [vmem:[#allocation5 + $0x60] sm:$0xf]
    %v114 = vld [vmem:[#allocation5 + $0x64] sm:$0xf]
    %v115 = vld [vmem:[#allocation5 + $0x68] sm:$0xf]
    %v116 = vld [vmem:[#allocation5 + $0x6c] sm:$0xf]
    %v117 = vld [vmem:[#allocation5 + $0x70] sm:$0xf]
    %v118 = vld [vmem:[#allocation5 + $0x74] sm:$0xf]
    %v119 = vld [vmem:[#allocation5 + $0x78] sm:$0xf]
    %v120 = vld [vmem:[#allocation5 + $0x7c] sm:$0xf]
    %v121 = vld [vmem:[%s2] sm:$0x1]
    %v123 = vlaneseq
    %v124 = vshrl.u32 %v123, 7
    %v125 = vsub.s32 0, %v124
    %v126 = vrot.slane %v121, %v125
    %v160 = vunpack.c.l.b16 %v89
    %v161 = vunpack.c.l.b16 %v90
    %v162 = vunpack.c.l.b16 %v91
    %v163 = vunpack.c.l.b16 %v92
    %v164 = vunpack.c.l.b16 %v93
    %v165 = vunpack.c.l.b16 %v94
    %v166 = vunpack.c.l.b16 %v95
    %v167 = vunpack.c.l.b16 %v96
    %v168 = vunpack.c.l.b16 %v97
    %v169 = vunpack.c.l.b16 %v98
    %v170 = vunpack.c.l.b16 %v99
    %v171 = vunpack.c.l.b16 %v100
    %v172 = vunpack.c.l.b16 %v101
    %v173 = vunpack.c.l.b16 %v102
    %v174 = vunpack.c.l.b16 %v103
    %v175 = vunpack.c.l.b16 %v104
    %v176 = vunpack.c.l.b16 %v105
    %v177 = vunpack.c.l.b16 %v106
    %v178 = vunpack.c.l.b16 %v107
    %v179 = vunpack.c.l.b16 %v108
    %v180 = vunpack.c.l.b16 %v109
    %v181 = vunpack.c.l.b16 %v110
    %v182 = vunpack.c.l.b16 %v111
    %v183 = vunpack.c.l.b16 %v112
    %v184 = vunpack.c.l.b16 %v113
    %v185 = vunpack.c.l.b16 %v114
    %v186 = vunpack.c.l.b16 %v115
    %v187 = vunpack.c.l.b16 %v116
    %v188 = vunpack.c.l.b16 %v117
    %v189 = vunpack.c.l.b16 %v118
    %v190 = vunpack.c.l.b16 %v119
    %v191 = vunpack.c.l.b16 %v120
    %v192 = vpack.c.b16 %v161, %v160
    %v193 = vpack.c.b16 %v163, %v162
    %v194 = vpack.c.b16 %v165, %v164
    %v195 = vpack.c.b16 %v167, %v166
    %v196 = vpack.c.b16 %v169, %v168
    %v197 = vpack.c.b16 %v171, %v170
    %v198 = vpack.c.b16 %v173, %v172
    %v199 = vpack.c.b16 %v175, %v174
    %v200 = vpack.c.b16 %v177, %v176
    %v201 = vpack.c.b16 %v179, %v178
    %v202 = vpack.c.b16 %v181, %v180
    %v203 = vpack.c.b16 %v183, %v182
    %v204 = vpack.c.b16 %v185, %v184
    %v205 = vpack.c.b16 %v187, %v186
    %v206 = vpack.c.b16 %v189, %v188
    %v207 = vpack.c.b16 %v191, %v190
    %224 = vmatprep.subr.bf16.mxu0 0
    %225 = vmatpush1.bf16.msra.mxu0 %v199
    %226 = vmatprep.subr.bf16.mxu0 0
    %227 = vmatpush1.bf16.msra.mxu0 %v198
    %228 = vmatprep.subr.bf16.mxu0 0
    %229 = vmatpush1.bf16.msra.mxu0 %v197
    %230 = vmatprep.subr.bf16.mxu0 0
    %231 = vmatpush1.bf16.msra.mxu0 %v196
    %232 = vmatprep.subr.bf16.mxu0 0
    %233 = vmatpush1.bf16.msra.mxu0 %v195
    %234 = vmatprep.subr.bf16.mxu0 0
    %235 = vmatpush1.bf16.msra.mxu0 %v194
    %236 = vmatprep.subr.bf16.mxu0 0
    %237 = vmatpush1.bf16.msra.mxu0 %v193
    %238 = vmatprep.subr.bf16.mxu0 0
    %239 = vmatpush1.bf16.msra.mxu0 %v192
    %240 = vmatprep.subr.bf16.mxu0 0
    %241 = vmatpush2.bf16.msra.mxu0 %v207
    %242 = vmatprep.subr.bf16.mxu0 0
    %243 = vmatpush2.bf16.msra.mxu0 %v206
    %244 = vmatprep.subr.bf16.mxu0 0
    %245 = vmatpush2.bf16.msra.mxu0 %v205
    %246 = vmatprep.subr.bf16.mxu0 0
    %247 = vmatpush2.bf16.msra.mxu0 %v204
    %248 = vmatprep.subr.bf16.mxu0 0
    %249 = vmatpush2.bf16.msra.mxu0 %v203
    %250 = vmatprep.subr.bf16.mxu0 0
    %251 = vmatpush2.bf16.msra.mxu0 %v202
    %252 = vmatprep.subr.bf16.mxu0 0
    %253 = vmatpush2.bf16.msra.mxu0 %v201
    %254 = vmatprep.subr.bf16.mxu0 0
    %255 = vmatpush2.bf16.msra.mxu0 %v200
    %256 = vmatprep.mubr.bf16.mxu0 %v88
    %257 = vmatmul.mubr.bf16.gmra.mxu0 %v87
    %v258 = vpop.f32.mrf.mxu0
    %v259 = vadd.f32 %v126, %v258
    %v260 = vpop.f32.mrf.mxu0
    %v261 = vpop.f32.mrf.mxu0
    %v262 = vadd.f32 %v126, %v261
    %v263 = vpop.f32.mrf.mxu0
    %264 = vdwg.mxu0
    %v265 = vmax.f32 %v259, 0.0
    %v266 = vmax.f32 %v262, 0.0
    %v267 = vpack.c.bf16 %v266, %v265
    %v268 = vld [vmem:[#allocation7] sm:$0xf]
    %v269 = vld [vmem:[#allocation7 + $0x4] sm:$0xf]
    %v270 = vld [vmem:[#allocation7 + $0x8] sm:$0xf]
    %v271 = vld [vmem:[#allocation7 + $0xc] sm:$0xf]
    %v272 = vld [vmem:[#allocation7 + $0x10] sm:$0xf]
    %v273 = vld [vmem:[#allocation7 + $0x14] sm:$0xf]
    %v274 = vld [vmem:[#allocation7 + $0x18] sm:$0xf]
    %v275 = vld [vmem:[#allocation7 + $0x1c] sm:$0xf]
    %v276 = vld [vmem:[#allocation7 + $0x20] sm:$0xf]
    %v277 = vld [vmem:[#allocation7 + $0x24] sm:$0xf]
    %v278 = vld [vmem:[#allocation7 + $0x28] sm:$0xf]
    %v279 = vld [vmem:[#allocation7 + $0x2c] sm:$0xf]
    %v280 = vld [vmem:[#allocation7 + $0x30] sm:$0xf]
    %v281 = vld [vmem:[#allocation7 + $0x34] sm:$0xf]
    %v282 = vld [vmem:[#allocation7 + $0x38] sm:$0xf]
    %v283 = vld [vmem:[#allocation7 + $0x3c] sm:$0xf]
    %v284 = vld [vmem:[%s4] sm:$0x1]
    %v286 = vlaneseq
    %v287 = vshrl.u32 %v286, 7
    %v288 = vsub.s32 0, %v287
    %v289 = vrot.slane %v284, %v288
    %v307 = vunpack.c.l.b16 %v268
    %v308 = vunpack.c.l.b16 %v269
    %v309 = vunpack.c.l.b16 %v270
    %v310 = vunpack.c.l.b16 %v271
    %v311 = vunpack.c.l.b16 %v272
    %v312 = vunpack.c.l.b16 %v273
    %v313 = vunpack.c.l.b16 %v274
    %v314 = vunpack.c.l.b16 %v275
    %v315 = vunpack.c.l.b16 %v276
    %v316 = vunpack.c.l.b16 %v277
    %v317 = vunpack.c.l.b16 %v278
    %v318 = vunpack.c.l.b16 %v279
    %v319 = vunpack.c.l.b16 %v280
    %v320 = vunpack.c.l.b16 %v281
    %v321 = vunpack.c.l.b16 %v282
    %v322 = vunpack.c.l.b16 %v283
    %v323 = vpack.c.b16 %v308, %v307
    %v324 = vpack.c.b16 %v310, %v309
    %v325 = vpack.c.b16 %v312, %v311
    %v326 = vpack.c.b16 %v314, %v313
    %v327 = vpack.c.b16 %v316, %v315
    %v328 = vpack.c.b16 %v318, %v317
    %v329 = vpack.c.b16 %v320, %v319
    %v330 = vpack.c.b16 %v322, %v321
    %339 = vmatprep.subr.bf16.mxu0 0
    %340 = vmatpush1.bf16.msra.mxu0 %v330
    %341 = vmatprep.subr.bf16.mxu0 0
    %342 = vmatpush1.bf16.msra.mxu0 %v329
    %343 = vmatprep.subr.bf16.mxu0 0
    %344 = vmatpush1.bf16.msra.mxu0 %v328
    %345 = vmatprep.subr.bf16.mxu0 0
    %346 = vmatpush1.bf16.msra.mxu0 %v327
    %347 = vmatprep.subr.bf16.mxu0 0
    %348 = vmatpush1.bf16.msra.mxu0 %v326
    %349 = vmatprep.subr.bf16.mxu0 0
    %350 = vmatpush1.bf16.msra.mxu0 %v325
    %351 = vmatprep.subr.bf16.mxu0 0
    %352 = vmatpush1.bf16.msra.mxu0 %v324
    %353 = vmatprep.subr.bf16.mxu0 0
    %354 = vmatpush1.bf16.msra.mxu0 %v323
    %355 = vmatprep.subr.bf16.mxu0 0
    %356 = vmatpush2.bf16.msra.mxu0 0
    %357 = vmatprep.subr.bf16.mxu0 0
    %358 = vmatpush2.bf16.msra.mxu0 0
    %359 = vmatprep.subr.bf16.mxu0 0
    %360 = vmatpush2.bf16.msra.mxu0 0
    %361 = vmatprep.subr.bf16.mxu0 0
    %362 = vmatpush2.bf16.msra.mxu0 0
    %363 = vmatprep.subr.bf16.mxu0 0
    %364 = vmatpush2.bf16.msra.mxu0 0
    %365 = vmatprep.subr.bf16.mxu0 0
    %366 = vmatpush2.bf16.msra.mxu0 0
    %367 = vmatprep.subr.bf16.mxu0 0
    %368 = vmatpush2.bf16.msra.mxu0 0
    %369 = vmatprep.subr.bf16.mxu0 0
    %370 = vmatpush2.bf16.msra.mxu0 0
    %371 = vmatprep.mubr.bf16.mxu0 0
    %372 = vmatmul.mubr.bf16.gmra.mxu0 %v267
    %v373 = vpop.f32.mrf.mxu0
    %v374 = vadd.f32 %v289, %v373
    %v375 = vpop.f32.mrf.mxu0
    %v376 = vpop.f32.mrf.mxu0
    %v377 = vadd.f32 %v289, %v376
    %v378 = vpop.f32.mrf.mxu0
    %379 = vdwg.mxu0
    %v380 = vmax.f32 %v374, 0.0
    %v381 = vmax.f32 %v377, 0.0
    %v382 = vpack.c.bf16 %v381, %v380
    %v383 = vld [vmem:[#allocation8] sm:$0xf]
    %v384 = vld [vmem:[#allocation8 + $0x4] sm:$0xf]
    %v385 = vld [vmem:[#allocation8 + $0x8] sm:$0xf]
    %v386 = vld [vmem:[#allocation8 + $0xc] sm:$0xf]
    %v387 = vld [vmem:[#allocation8 + $0x10] sm:$0xf]
    %v388 = vld [vmem:[#allocation8 + $0x14] sm:$0xf]
    %v389 = vld [vmem:[#allocation8 + $0x18] sm:$0xf]
    %v390 = vld [vmem:[#allocation8 + $0x1c] sm:$0xf]
    %v391 = vld [vmem:[#allocation8 + $0x20] sm:$0xf]
    %v392 = vld [vmem:[#allocation8 + $0x24] sm:$0xf]
    %v393 = vld [vmem:[#allocation8 + $0x28] sm:$0xf]
    %v394 = vld [vmem:[#allocation8 + $0x2c] sm:$0xf]
    %v395 = vld [vmem:[#allocation8 + $0x30] sm:$0xf]
    %v396 = vld [vmem:[#allocation8 + $0x34] sm:$0xf]
    %v397 = vld [vmem:[#allocation8 + $0x38] sm:$0xf]
    %v398 = vld [vmem:[#allocation8 + $0x3c] sm:$0xf]
    %v399 = vld [vmem:[%s6] sm:$0x1]
    %v401 = vlaneseq
    %v402 = vshrl.u32 %v401, 7
    %v403 = vsub.s32 0, %v402
    %v404 = vrot.slane %v399, %v403
    %v422 = vunpack.c.l.b16 %v383
    %v423 = vunpack.c.l.b16 %v384
    %v424 = vunpack.c.l.b16 %v385
    %v425 = vunpack.c.l.b16 %v386
    %v426 = vunpack.c.l.b16 %v387
    %v427 = vunpack.c.l.b16 %v388
    %v428 = vunpack.c.l.b16 %v389
    %v429 = vunpack.c.l.b16 %v390
    %v430 = vunpack.c.l.b16 %v391
    %v431 = vunpack.c.l.b16 %v392
    %v432 = vunpack.c.l.b16 %v393
    %v433 = vunpack.c.l.b16 %v394
    %v434 = vunpack.c.l.b16 %v395
    %v435 = vunpack.c.l.b16 %v396
    %v436 = vunpack.c.l.b16 %v397
    %v437 = vunpack.c.l.b16 %v398
    %v438 = vpack.c.b16 %v423, %v422
    %v439 = vpack.c.b16 %v425, %v424
    %v440 = vpack.c.b16 %v427, %v426
    %v441 = vpack.c.b16 %v429, %v428
    %v442 = vpack.c.b16 %v431, %v430
    %v443 = vpack.c.b16 %v433, %v432
    %v444 = vpack.c.b16 %v435, %v434
    %v445 = vpack.c.b16 %v437, %v436
    %454 = vmatprep.subr.bf16.mxu0 0
    %455 = vmatpush1.bf16.msra.mxu0 %v445
    %456 = vmatprep.subr.bf16.mxu0 0
    %457 = vmatpush1.bf16.msra.mxu0 %v444
    %458 = vmatprep.subr.bf16.mxu0 0
    %459 = vmatpush1.bf16.msra.mxu0 %v443
    %460 = vmatprep.subr.bf16.mxu0 0
    %461 = vmatpush1.bf16.msra.mxu0 %v442
    %462 = vmatprep.subr.bf16.mxu0 0
    %463 = vmatpush1.bf16.msra.mxu0 %v441
    %464 = vmatprep.subr.bf16.mxu0 0
    %465 = vmatpush1.bf16.msra.mxu0 %v440
    %466 = vmatprep.subr.bf16.mxu0 0
    %467 = vmatpush1.bf16.msra.mxu0 %v439
    %468 = vmatprep.subr.bf16.mxu0 0
    %469 = vmatpush1.bf16.msra.mxu0 %v438
    %470 = vmatprep.subr.bf16.mxu0 0
    %471 = vmatpush2.bf16.msra.mxu0 0
    %472 = vmatprep.subr.bf16.mxu0 0
    %473 = vmatpush2.bf16.msra.mxu0 0
    %474 = vmatprep.subr.bf16.mxu0 0
    %475 = vmatpush2.bf16.msra.mxu0 0
    %476 = vmatprep.subr.bf16.mxu0 0
    %477 = vmatpush2.bf16.msra.mxu0 0
    %478 = vmatprep.subr.bf16.mxu0 0
    %479 = vmatpush2.bf16.msra.mxu0 0
    %480 = vmatprep.subr.bf16.mxu0 0
    %481 = vmatpush2.bf16.msra.mxu0 0
    %482 = vmatprep.subr.bf16.mxu0 0
    %483 = vmatpush2.bf16.msra.mxu0 0
    %484 = vmatprep.subr.bf16.mxu0 0
    %485 = vmatpush2.bf16.msra.mxu0 0
    %486 = vmatprep.mubr.bf16.mxu0 0
    %487 = vmatmul.mubr.bf16.gmra.mxu0 %v382
    %v488 = vpop.f32.mrf.mxu0
    %v489 = vadd.f32 %v404, %v488
    %v490 = vpop.f32.mrf.mxu0
    %v491 = vpop.f32.mrf.mxu0
    %v492 = vadd.f32 %v404, %v491
    %v493 = vpop.f32.mrf.mxu0
    %494 = vdwg.mxu0
    %v495 = vpack.c.bf16 %v492, %v489
    %v497 = vunpack.c.l.b16 %v495
    %v498 = vunpack.c.h.b16 %v495
    %v499 = vpack.c.b16 %v497, %v497
    %v500 = vpack.c.b16 %v498, %v498
    %503 = vst [vmem:[#allocation10] sm:$0xf] %v499
    %504 = vst [vmem:[#allocation10 + $0x4] sm:$0xf] %v500
    // Predicated region
    $region46: #{tpu_custom_call.1} parent=1 // pred_check
      _
    $region47: #{tpu_custom_call.1} parent=1 // pred_check_branch
      %506 = sbr.rel (0) target = $region49
    $region48: #{tpu_custom_call.1} parent=1 // pred_region
      %s508 = ssub.s32 128, 128
      %509 = vsyncadd [#allocation4], %s508
      %s510 = sshll.u32 [#allocation10], 4
      %s511 = int_to_ptr.vmem [resolvable:$true] %s510
      %516 = dma.vmem_to_hbm [thread:$0]  %s511, 128, %s7, [#allocation4], 64, 64, 4
    $region49: #{tpu_custom_call.1} parent=1 // pred_fallthru
      _
    // Predicated region
    $region50: #{tpu_custom_call.1} parent=1 // pred_check
      _
    $region51: #{tpu_custom_call.1} parent=1 // pred_check_branch
      %518 = sbr.rel (0) target = $region53
    $region52: #{tpu_custom_call.1} parent=1 // pred_region
      %519 = dma.done [#allocation4], 128
    $region53: #{tpu_custom_call.1} parent=1 // pred_fallthru
      _
    %520 = vsyncpa [#allocation3], 1
    %521 = vsyncpa [#allocation6], 1
    %522 = vsyncpa [#allocation9], 1
    %523 = vsyncpa [#allocation4], 1

</llo_original>
